<compile_context>
chip_gen: v7x
topology: tpu7x:2x2x1
jax: 0.10.0
libtpu: 0.0.40
codegen_flags: <defaults>
</compile_context>

<pallas_src>
import functools

import jax
import jax.numpy as jnp
from jax import lax
from jax.experimental import pallas as pl
from jax.experimental.pallas import tpu as pltpu


_LANE = 128
_DEFAULT_TILE_B = 131072   # ~16 MiB double-buffered working set; sweep 64K-256K
_MAX_TILE = 262144         # hard ceiling: 128*tile B ~= 32 MiB, fits every gen
_MIN_GRID_STEPS = 4        # >= 2 grid steps per TensorCore on v7x (2 TCs/chip)


def _round_up(n, m):
    return ((n + m - 1) // m) * m


def _cdiv(a, b):
    return (a + b - 1) // b


def _choose_tile(Bp, tile_b):
    """Pick the batch tile (lane) size for a 128-padded batch Bp."""
    tile = min(tile_b, Bp, _MAX_TILE)
    if Bp >= _MIN_GRID_STEPS * _LANE:
        # Keep at least 4 grid steps so v7x's two TensorCores each get >= 2.
        tile = min(tile, _round_up(_cdiv(Bp, _MIN_GRID_STEPS), _LANE))
    tile = max(_LANE, _round_up(tile, _LANE))
    return min(tile, Bp)


def iris_mlp_kernel(xT_ref, w1_ref, b1_ref, w2_ref, b2_ref, oT_ref):
    # xT_ref : [4, TILE_B]   features on sublanes, batch on lanes (streamed)
    # w1_ref : [16, 4]       PyTorch layout [out, in]   (resident)
    # b1_ref : [16, 1]                                   (resident)
    # w2_ref : [3, 16]                                   (resident)
    # b2_ref : [3, 1]                                    (resident)
    # oT_ref : [3, TILE_B]
    xT = xT_ref[...]
    h = jnp.dot(w1_ref[...], xT, preferred_element_type=jnp.float32) + b1_ref[...]
    h = jnp.maximum(h, 0.0)                                    # ReLU
    y = jnp.dot(w2_ref[...], h, preferred_element_type=jnp.float32) + b2_ref[...]
    oT_ref[...] = y.astype(oT_ref.dtype)


@functools.partial(jax.jit, static_argnames=("tile_b",))
def iris_classifier_forward_fmajor(xT, w1, b1, w2, b2, *, tile_b=_DEFAULT_TILE_B):
    """IrisClassifier forward on feature-major activations.

    xT : [4, B] f32 (batch on the fast/lane axis) -> returns [3, B] f32.
    Keeping activations feature-major across the surrounding model and calling
    this entry point directly avoids the transpose HBM round-trips of the
    row-major wrapper below.
    """
    B = xT.shape[1]
    Bp = _round_up(B, _LANE)                 # pad only to 128, NOT to a tile multiple
    tile = _choose_tile(Bp, tile_b)
    grid = _cdiv(Bp, tile)                   # ragged last block handled by Pallas

    # Fused pad of the lane axis (no full-buffer zero fill + dynamic_update_slice).
    xTp = lax.pad(xT.astype(jnp.float32), jnp.float32(0.0),
                  [(0, 0, 0), (0, Bp - B, 0)])
    b1c = b1.reshape(-1, 1).astype(jnp.float32)
    b2c = b2.reshape(-1, 1).astype(jnp.float32)
    w1f = w1.astype(jnp.float32)
    w2f = w2.astype(jnp.float32)
    weight_bytes = 4 * (w1f.size + b1c.size + w2f.size + b2c.size)

    # VMEM budget with sublane padding: [4,tile] and [3,tile] blocks both pad to
    # 8 sublanes -> 32*tile bytes per buffer; double-buffered x + out -> 128*tile,
    # plus resident weights / slack.  Raise the scoped limit only when we exceed
    # the smallest (v5e, 16 MiB) default; cap at 48 MiB for v7x's 64 MiB/TC VMEM.
    vmem_needed = 128 * tile + (2 << 20)
    compiler_kwargs = dict(dimension_semantics=("parallel",))   # megacore batch split
    if vmem_needed > (16 << 20):
        compiler_kwargs["vmem_limit_bytes"] = int(min(vmem_needed, 48 << 20))

    yT = pl.pallas_call(
        iris_mlp_kernel,
        out_shape=jax.ShapeDtypeStruct((3, Bp), jnp.float32),
        grid=(grid,),
        in_specs=[
            pl.BlockSpec((4, tile), lambda i: (0, i)),   # x tile: streamed per step
            pl.BlockSpec((16, 4), lambda i: (0, 0)),     # weights/biases: resident
            pl.BlockSpec((16, 1), lambda i: (0, 0)),
            pl.BlockSpec((3, 16), lambda i: (0, 0)),
            pl.BlockSpec((3, 1), lambda i: (0, 0)),
        ],
        out_specs=pl.BlockSpec((3, tile), lambda i: (0, i)),
        compiler_params=pltpu.CompilerParams(**compiler_kwargs),
        cost_estimate=pl.CostEstimate(
            flops=224 * Bp,                              # 2*4*16 + 2*16*3 per sample
            bytes_accessed=28 * Bp + weight_bytes,       # 16B in + 12B out per sample
            transcendentals=0,
        ),
    )(xTp, w1f, b1c, w2f, b2c)

    # Drop padded lanes (they hold relu(b1)-derived / boundary-block garbage).
    return yT[:, :B]


@functools.partial(jax.jit, static_argnames=("tile_b",))
def iris_classifier_forward(x, w1, b1, w2, b2, *, tile_b=_DEFAULT_TILE_B):
    """Forward pass of IrisClassifier in the PyTorch convention.

    x : [B, 4] f32;  w1: [16, 4], b1: [16], w2: [3, 16], b2: [3];  returns [B, 3].
    # TODO(synk): if the surrounding model can keep activations feature-major
    # ([features, batch]), call iris_classifier_forward_fmajor directly and skip
    # these two wrapper transposes (the op is HBM-bound, so they matter).
    """
    yT = iris_classifier_forward_fmajor(x.T, w1, b1, w2, b2, tile_b=tile_b)
    return yT.T


def init_params(key):
    """Deterministic init mimicking PyTorch nn.Linear default (U[-1/sqrt(fan_in), +]).

    Weights are in the native PyTorch [out_features, in_features] layout.
    """
    k1, k2, k3, k4 = jax.random.split(key, 4)
    bound1 = 1.0 / jnp.sqrt(4.0)
    bound2 = 1.0 / jnp.sqrt(16.0)
    w1 = jax.random.uniform(k1, (16, 4), jnp.float32, -bound1, bound1)   # fc1.weight
    b1 = jax.random.uniform(k2, (16,), jnp.float32, -bound1, bound1)     # fc1.bias
    w2 = jax.random.uniform(k3, (3, 16), jnp.float32, -bound2, bound2)   # fc2.weight
    b2 = jax.random.uniform(k4, (3,), jnp.float32, -bound2, bound2)      # fc2.bias
    return w1, b1, w2, b2


if __name__ == "__main__":
    key = jax.random.PRNGKey(0)
    kx, kp = jax.random.split(key)

    w1, b1, w2, b2 = init_params(kp)

    def ref_fwd(x):
        # Pure-JAX reference of the PyTorch forward: relu(x @ W1.T + b1) @ W2.T + b2
        return jnp.maximum(x @ w1.T + b1, 0.0) @ w2.T + b2

    # 1) Small single-tile case (matches the Iris deployment batch).
    B = 8
    x = jax.random.normal(kx, (B, 4), jnp.float32)
    out = jax.block_until_ready(iris_classifier_forward(x, w1, b1, w2, b2))
    assert out.shape == (B, 3)
    assert jnp.allclose(out, ref_fwd(x), atol=1e-5, rtol=1e-5)

    # 2) Multi-step grid with small tiles (exercises batch tiling + resident weights).
    B2 = 300
    x2 = jax.random.normal(kx, (B2, 4), jnp.float32)
    out2 = jax.block_until_ready(
        iris_classifier_forward(x2, w1, b1, w2, b2, tile_b=128))
    assert out2.shape == (B2, 3)
    assert jnp.allclose(out2, ref_fwd(x2), atol=1e-5, rtol=1e-5)

    # 3) Ragged cdiv grid (Bp=640, tile=256, 3 steps, boundary block) through the
    #    feature-major entry point (no wrapper transposes).
    B3 = 520
    x3 = jax.random.normal(kx, (B3, 4), jnp.float32)
    out3T = jax.block_until_ready(
        iris_classifier_forward_fmajor(x3.T, w1, b1, w2, b2))
    assert out3T.shape == (3, B3)
    assert jnp.allclose(out3T.T, ref_fwd(x3), atol=1e-5, rtol=1e-5)

    print("KERNEL_OK")
</pallas_src>

<mosaic_0001>
module attributes {stable_mosaic.version = 11 : i64} {
  func.func @iris_mlp_kernel(%arg0: i32, %arg1: memref<4x128xf32, #tpu.memory_space<vmem>>, %arg2: memref<16x4xf32, #tpu.memory_space<vmem>>, %arg3: memref<16x1xf32, #tpu.memory_space<vmem>>, %arg4: memref<3x16xf32, #tpu.memory_space<vmem>>, %arg5: memref<3x1xf32, #tpu.memory_space<vmem>>, %arg6: memref<3x128xf32, #tpu.memory_space<vmem>>) attributes {dimension_semantics = [#tpu.dimension_semantics<parallel>], iteration_bounds = array<i64: 1>, scalar_prefetch = 0 : i64, scratch_operands = 0 : i64, tpu.core_type = #tpu.core_type<tc>, window_params = [{transform_indices = @transform_0, window_bounds = array<i64: 4, 128>}, {pipeline_mode = #tpu.pipeline_mode<synchronous>, transform_indices = @transform_1, window_bounds = array<i64: 16, 4>}, {pipeline_mode = #tpu.pipeline_mode<synchronous>, transform_indices = @transform_2, window_bounds = array<i64: 16, 1>}, {pipeline_mode = #tpu.pipeline_mode<synchronous>, transform_indices = @transform_3, window_bounds = array<i64: 3, 16>}, {pipeline_mode = #tpu.pipeline_mode<synchronous>, transform_indices = @transform_4, window_bounds = array<i64: 3, 1>}, {transform_indices = @transform_5, window_bounds = array<i64: 3, 128>}]} {
    %c0 = arith.constant 0 : index
    %c0_0 = arith.constant 0 : index
    %0 = vector.load %arg1[%c0, %c0_0] : memref<4x128xf32, #tpu.memory_space<vmem>>, vector<4x128xf32>
    %c0_1 = arith.constant 0 : index
    %c0_2 = arith.constant 0 : index
    %1 = vector.load %arg2[%c0_1, %c0_2] : memref<16x4xf32, #tpu.memory_space<vmem>>, vector<16x4xf32>
    %cst = arith.constant dense<0.000000e+00> : vector<16x128xf32>
    %2 = tpu.matmul %1, %0, %cst {dimension_numbers = #tpu.dot_dimension_numbers<[1], [0], [0], [1], [0, 0, 1, 1], [], []>} : vector<16x4xf32>, vector<4x128xf32>, vector<16x128xf32> -> vector<16x128xf32>
    %c0_3 = arith.constant 0 : index
    %c0_4 = arith.constant 0 : index
    %3 = vector.load %arg3[%c0_3, %c0_4] : memref<16x1xf32, #tpu.memory_space<vmem>>, vector<16x1xf32>
    %4 = vector.broadcast %3 : vector<16x1xf32> to vector<16x128xf32>
    %5 = arith.addf %2, %4 : vector<16x128xf32>
    %cst_5 = arith.constant 0.000000e+00 : f32
    %6 = vector.broadcast %cst_5 : f32 to vector<16x128xf32>
    %7 = arith.maximumf %5, %6 : vector<16x128xf32>
    %c0_6 = arith.constant 0 : index
    %c0_7 = arith.constant 0 : index
    %8 = vector.load %arg4[%c0_6, %c0_7] : memref<3x16xf32, #tpu.memory_space<vmem>>, vector<3x16xf32>
    %cst_8 = arith.constant dense<0.000000e+00> : vector<3x128xf32>
    %9 = tpu.matmul %8, %7, %cst_8 {dimension_numbers = #tpu.dot_dimension_numbers<[1], [0], [0], [1], [0, 0, 1, 1], [], []>} : vector<3x16xf32>, vector<16x128xf32>, vector<3x128xf32> -> vector<3x128xf32>
    %c0_9 = arith.constant 0 : index
    %c0_10 = arith.constant 0 : index
    %10 = vector.load %arg5[%c0_9, %c0_10] : memref<3x1xf32, #tpu.memory_space<vmem>>, vector<3x1xf32>
    %11 = vector.broadcast %10 : vector<3x1xf32> to vector<3x128xf32>
    %12 = arith.addf %9, %11 : vector<3x128xf32>
    %c0_11 = arith.constant 0 : index
    %c0_12 = arith.constant 0 : index
    %13 = vector.load %arg6[%c0_11, %c0_12] : memref<3x128xf32, #tpu.memory_space<vmem>>, vector<3x128xf32>
    tpu.vector_store %arg6[%c0_11, %c0_12], %12 {strides = array<i32>} : memref<3x128xf32, #tpu.memory_space<vmem>>, vector<3x128xf32>,
    return
  }
  func.func @transform_0(%arg0: i32) -> (i32, i32) {
    %c0_i32 = arith.constant 0 : i32
    %c0_i32_0 = arith.constant 0 : i32
    return %c0_i32, %arg0 : i32, i32
  }
  func.func @transform_1(%arg0: i32) -> (i32, i32) {
    %c0_i32 = arith.constant 0 : i32
    %c0_i32_0 = arith.constant 0 : i32
    %c0_i32_1 = arith.constant 0 : i32
    return %c0_i32, %c0_i32_0 : i32, i32
  }
  func.func @transform_2(%arg0: i32) -> (i32, i32) {
    %c0_i32 = arith.constant 0 : i32
    %c0_i32_0 = arith.constant 0 : i32
    %c0_i32_1 = arith.constant 0 : i32
    return %c0_i32, %c0_i32_0 : i32, i32
  }
  func.func @transform_3(%arg0: i32) -> (i32, i32) {
    %c0_i32 = arith.constant 0 : i32
    %c0_i32_0 = arith.constant 0 : i32
    %c0_i32_1 = arith.constant 0 : i32
    return %c0_i32, %c0_i32_0 : i32, i32
  }
  func.func @transform_4(%arg0: i32) -> (i32, i32) {
    %c0_i32 = arith.constant 0 : i32
    %c0_i32_0 = arith.constant 0 : i32
    %c0_i32_1 = arith.constant 0 : i32
    return %c0_i32, %c0_i32_0 : i32, i32
  }
  func.func @transform_5(%arg0: i32) -> (i32, i32) {
    %c0_i32 = arith.constant 0 : i32
    %c0_i32_0 = arith.constant 0 : i32
    return %c0_i32, %arg0 : i32, i32
  }
}

</mosaic_0001>

<llo_original>
// kernel: iris_classifier_forward_fmajor.1
$region0: #{iris_classifier_forward_fmajor.1}
  #allocation0 [shape = 'u32[]', space=smem, size = 0x4, offset = 0x4, fixed_abs, tag = 'smem constant byte address 0x4 - core index']
  #allocation1 [shape = 'u32[144,128]{1,0:T(1,128)}', space=vmem, size = 0x12000, scoped, tag = 'internal scratch']
  %s0 = inlined_call_operand.vmem [shape: f32[4,128], index: 0, kind: input, shape index: {}]
  %s1 = inlined_call_operand.vmem [shape: f32[16,4], index: 1, kind: input, shape index: {}]
  %s2 = inlined_call_operand.vmem [shape: f32[16,1], index: 2, kind: input, shape index: {}]
  %s3 = inlined_call_operand.vmem [shape: f32[3,16], index: 3, kind: input, shape index: {}]
  %s4 = inlined_call_operand.vmem [shape: f32[3,1], index: 4, kind: input, shape index: {}]
  %s5 = inlined_call_operand.hbm [shape: f32[3,128], index: 5, kind: output, shape index: {}]
  %s6 = sld [smem:[#allocation0]]
  $region30: #{iris_classifier_forward_fmajor.1} parent=0
    _
  %s8 = ssub.s32 1, %s6
  %s9 = scalar_select 0, %s8, %s6
  $region1: #{iris_classifier_forward_fmajor.1} parent=0
    #allocation2 [shape = 'u8[2048]{0}', space=vmem, size = 0x800, scoped, tag = 'output window, operand 0, single buffered']
    #allocation3 [shape = 's32[1]{0}', space=sflag, size = 0x4, scoped, tag = 'scoped memory for iris_classifier_forward_fmajor.1']
    %10 = vsyncpa [#allocation3], 0
    // Predicated region
    $region2: #{iris_classifier_forward_fmajor.1} parent=1 // pred_check
      _
    $region3: #{iris_classifier_forward_fmajor.1} parent=1 // pred_check_branch
      %12 = sbr.rel (0) target = $region5
    $region4: #{iris_classifier_forward_fmajor.1} parent=1 // pred_region
      _
    $region5: #{iris_classifier_forward_fmajor.1} parent=1 // pred_fallthru
      _
    // Predicated region
    $region6: #{iris_classifier_forward_fmajor.1} parent=1 // pred_check
      _
    $region7: #{iris_classifier_forward_fmajor.1} parent=1 // pred_check_branch
      %14 = sbr.rel (0) target = $region9
    $region8: #{iris_classifier_forward_fmajor.1} parent=1 // pred_region
      _
    $region9: #{iris_classifier_forward_fmajor.1} parent=1 // pred_fallthru
      _
    // Predicated region
    $region10: #{iris_classifier_forward_fmajor.1} parent=1 // pred_check
      _
    $region11: #{iris_classifier_forward_fmajor.1} parent=1 // pred_check_branch
      %16 = sbr.rel (0) target = $region13
    $region12: #{iris_classifier_forward_fmajor.1} parent=1 // pred_region
      _
    $region13: #{iris_classifier_forward_fmajor.1} parent=1 // pred_fallthru
      _
    // Predicated region
    $region14: #{iris_classifier_forward_fmajor.1} parent=1 // pred_check
      _
    $region15: #{iris_classifier_forward_fmajor.1} parent=1 // pred_check_branch
      %18 = sbr.rel (0) target = $region17
    $region16: #{iris_classifier_forward_fmajor.1} parent=1 // pred_region
      _
    $region17: #{iris_classifier_forward_fmajor.1} parent=1 // pred_fallthru
      _
    // Predicated region
    $region18: #{iris_classifier_forward_fmajor.1} parent=1 // pred_check
      _
    $region19: #{iris_classifier_forward_fmajor.1} parent=1 // pred_check_branch
      %20 = sbr.rel (0) target = $region21
    $region20: #{iris_classifier_forward_fmajor.1} parent=1 // pred_region
      _
    $region21: #{iris_classifier_forward_fmajor.1} parent=1 // pred_fallthru
      _
    %v21 = vld [vmem:[%s0] sm:$0xf]
    %v22 = vld [vmem:[%s1] sm:$0xff]
    %v23 = vld [vmem:[%s1 + $0x8] sm:$0xff]
    %v24 = vld [vmem:[%s2] sm:$0xff]
    %v25 = vld [vmem:[%s2 + $0x8] sm:$0xff]
    %27 = vset.pattern.permute.xlu0 0
    %28 = vperm.xlu0 %27, %v24
    %v29 = vpop.permute.xlu0 %28
    %32 = vset.pattern.permute.xlu0 0
    %33 = vperm.xlu0 %32, %v25
    %v34 = vpop.permute.xlu0 %33
    %vm36 = vcmask 31744
    %v38 = vsel %vm36, %v22, 0
    %v41 = vsel %vm36, %v23, 0
    %vm43 = vcmask 1043456
    %v45 = vsel %vm43, %v21, 0
    %47 = vmatprep.subr.mxu0 0.0
    %48 = vmatpush1.msra.mxu0 %v45
    %49 = vmatprep.subr.mxu0 0.0
    %50 = vmatpush1.msra.mxu0 0.0
    %51 = vmatprep.subr.mxu0 0.0
    %52 = vmatpush1.msra.mxu0 0.0
    %53 = vmatprep.subr.mxu0 0.0
    %54 = vmatpush1.msra.mxu0 0.0
    %55 = vmatprep.subr.mxu0 0.0
    %56 = vmatpush1.msra.mxu0 0.0
    %57 = vmatprep.subr.mxu0 0.0
    %58 = vmatpush1.msra.mxu0 0.0
    %59 = vmatprep.subr.mxu0 0.0
    %60 = vmatpush1.msra.mxu0 0.0
    %61 = vmatprep.subr.mxu0 0.0
    %62 = vmatpush1.msra.mxu0 0.0
    %63 = vmatprep.subr.mxu0 0.0
    %64 = vmatpush1.msra.mxu0 0.0
    %65 = vmatprep.subr.mxu0 0.0
    %66 = vmatpush1.msra.mxu0 0.0
    %67 = vmatprep.subr.mxu0 0.0
    %68 = vmatpush1.msra.mxu0 0.0
    %69 = vmatprep.subr.mxu0 0.0
    %70 = vmatpush1.msra.mxu0 0.0
    %71 = vmatprep.subr.mxu0 0.0
    %72 = vmatpush1.msra.mxu0 0.0
    %73 = vmatprep.subr.mxu0 0.0
    %74 = vmatpush1.msra.mxu0 0.0
    %75 = vmatprep.subr.mxu0 0.0
    %76 = vmatpush1.msra.mxu0 0.0
    %77 = vmatprep.subr.mxu0 0.0
    %78 = vmatpush1.msra.mxu0 0.0
    %79 = vmatprep.subr.mxu0 0.0
    %80 = vmatpush1.msra.mxu0 0.0
    %81 = vmatprep.subr.mxu0 0.0
    %82 = vmatpush1.msra.mxu0 0.0
    %83 = vmatprep.subr.mxu0 0.0
    %84 = vmatpush1.msra.mxu0 0.0
    %85 = vmatprep.subr.mxu0 0.0
    %86 = vmatpush1.msra.mxu0 0.0
    %87 = vmatprep.subr.mxu0 0.0
    %88 = vmatpush1.msra.mxu0 0.0
    %89 = vmatprep.subr.mxu0 0.0
    %90 = vmatpush1.msra.mxu0 0.0
    %91 = vmatprep.subr.mxu0 0.0
    %92 = vmatpush1.msra.mxu0 0.0
    %93 = vmatprep.subr.mxu0 0.0
    %94 = vmatpush1.msra.mxu0 0.0
    %95 = vmatprep.subr.mxu0 0.0
    %96 = vmatpush1.msra.mxu0 0.0
    %97 = vmatprep.subr.mxu0 0.0
    %98 = vmatpush1.msra.mxu0 0.0
    %99 = vmatprep.subr.mxu0 0.0
    %100 = vmatpush1.msra.mxu0 0.0
    %101 = vmatprep.subr.mxu0 0.0
    %102 = vmatpush1.msra.mxu0 0.0
    %103 = vmatprep.subr.mxu0 0.0
    %104 = vmatpush1.msra.mxu0 0.0
    %105 = vmatprep.subr.mxu0 0.0
    %106 = vmatpush1.msra.mxu0 0.0
    %107 = vmatprep.subr.mxu0 0.0
    %108 = vmatpush1.msra.mxu0 0.0
    %109 = vmatprep.subr.mxu0 0.0
    %110 = vmatpush1.msra.mxu0 0.0
    %111 = vmatprep.mubr.f32.mxu0 0.0
    %112 = vmatmul.mubr.f32.gmra.mrb[0].mxu0 %v38
    %v113 = vpop.f32.mrb[0].mxu0
    %v114 = vadd.f32 %v29, %v113
    %v115 = vpop.f32.mrb[0].mxu0
    %116 = vmatprep.mubr.f32.mxu0 0.0
    %117 = vmatmul.mubr.f32.gmra.mrb[0].mxu0 %v41
    %v118 = vpop.f32.mrb[0].mxu0
    %v119 = vadd.f32 %v34, %v118
    %v120 = vpop.f32.mrb[0].mxu0
    %121 = vdwg.mxu0
    %v122 = vmax.f32 %v114, 0.0
    %v123 = vmax.f32 %v119, 0.0
    %v124 = vld [vmem:[%s3] sm:$0x7]
    %v125 = vld [vmem:[%s4] sm:$0x7]
    %127 = vset.pattern.permute.xlu0 0
    %128 = vperm.xlu0 %127, %v125
    %v129 = vpop.permute.xlu0 %128
    %vm131 = vcmask 130048
    %v133 = vsel %vm131, %v124, 0
    %135 = vmatprep.subr.mxu0 0.0
    %136 = vmatpush1.msra.mxu0 %v122
    %137 = vmatprep.subr.mxu0 0.0
    %138 = vmatpush1.msra.mxu0 %v123
    %139 = vmatprep.subr.mxu0 0.0
    %140 = vmatpush1.msra.mxu0 0.0
    %141 = vmatprep.subr.mxu0 0.0
    %142 = vmatpush1.msra.mxu0 0.0
    %143 = vmatprep.subr.mxu0 0.0
    %144 = vmatpush1.msra.mxu0 0.0
    %145 = vmatprep.subr.mxu0 0.0
    %146 = vmatpush1.msra.mxu0 0.0
    %147 = vmatprep.subr.mxu0 0.0
    %148 = vmatpush1.msra.mxu0 0.0
    %149 = vmatprep.subr.mxu0 0.0
    %150 = vmatpush1.msra.mxu0 0.0
    %151 = vmatprep.subr.mxu0 0.0
    %152 = vmatpush1.msra.mxu0 0.0
    %153 = vmatprep.subr.mxu0 0.0
    %154 = vmatpush1.msra.mxu0 0.0
    %155 = vmatprep.subr.mxu0 0.0
    %156 = vmatpush1.msra.mxu0 0.0
    %157 = vmatprep.subr.mxu0 0.0
    %158 = vmatpush1.msra.mxu0 0.0
    %159 = vmatprep.subr.mxu0 0.0
    %160 = vmatpush1.msra.mxu0 0.0
    %161 = vmatprep.subr.mxu0 0.0
    %162 = vmatpush1.msra.mxu0 0.0
    %163 = vmatprep.subr.mxu0 0.0
    %164 = vmatpush1.msra.mxu0 0.0
    %165 = vmatprep.subr.mxu0 0.0
    %166 = vmatpush1.msra.mxu0 0.0
    %167 = vmatprep.subr.mxu0 0.0
    %168 = vmatpush1.msra.mxu0 0.0
    %169 = vmatprep.subr.mxu0 0.0
    %170 = vmatpush1.msra.mxu0 0.0
    %171 = vmatprep.subr.mxu0 0.0
    %172 = vmatpush1.msra.mxu0 0.0
    %173 = vmatprep.subr.mxu0 0.0
    %174 = vmatpush1.msra.mxu0 0.0
    %175 = vmatprep.subr.mxu0 0.0
    %176 = vmatpush1.msra.mxu0 0.0
    %177 = vmatprep.subr.mxu0 0.0
    %178 = vmatpush1.msra.mxu0 0.0
    %179 = vmatprep.subr.mxu0 0.0
    %180 = vmatpush1.msra.mxu0 0.0
    %181 = vmatprep.subr.mxu0 0.0
    %182 = vmatpush1.msra.mxu0 0.0
    %183 = vmatprep.subr.mxu0 0.0
    %184 = vmatpush1.msra.mxu0 0.0
    %185 = vmatprep.subr.mxu0 0.0
    %186 = vmatpush1.msra.mxu0 0.0
    %187 = vmatprep.subr.mxu0 0.0
    %188 = vmatpush1.msra.mxu0 0.0
    %189 = vmatprep.subr.mxu0 0.0
    %190 = vmatpush1.msra.mxu0 0.0
    %191 = vmatprep.subr.mxu0 0.0
    %192 = vmatpush1.msra.mxu0 0.0
    %193 = vmatprep.subr.mxu0 0.0
    %194 = vmatpush1.msra.mxu0 0.0
    %195 = vmatprep.subr.mxu0 0.0
    %196 = vmatpush1.msra.mxu0 0.0
    %197 = vmatprep.subr.mxu0 0.0
    %198 = vmatpush1.msra.mxu0 0.0
    %199 = vmatprep.mubr.f32.mxu0 0.0
    %200 = vmatmul.mubr.f32.gmra.mrb[0].mxu0 %v133
    %v201 = vpop.f32.mrb[0].mxu0
    %v202 = vadd.f32 %v129, %v201
    %v203 = vpop.f32.mrb[0].mxu0
    %204 = vdwg.mxu0
    %205 = vst [vmem:[#allocation2] sm:$0x7] %v202
    // Predicated region
    $region22: #{iris_classifier_forward_fmajor.1} parent=1 // pred_check
      _
    $region23: #{iris_classifier_forward_fmajor.1} parent=1 // pred_check_branch
      %207 = sbr.rel (0) target = $region25
    $region24: #{iris_classifier_forward_fmajor.1} parent=1 // pred_region
      %s209 = ssub.s32 64, 64
      %210 = vsyncadd [#allocation3], %s209
      %s212 = sshll.u32 [#allocation2], 4
      %s213 = int_to_ptr.vmem [resolvable:$true] %s212
      %215 = dma.vmem_to_hbm [thread:$0]  %s213, 64, %s5, [#allocation3]
    $region25: #{iris_classifier_forward_fmajor.1} parent=1 // pred_fallthru
      _
    // Predicated region
    $region26: #{iris_classifier_forward_fmajor.1} parent=1 // pred_check
      _
    $region27: #{iris_classifier_forward_fmajor.1} parent=1 // pred_check_branch
      %217 = sbr.rel (0) target = $region29
    $region28: #{iris_classifier_forward_fmajor.1} parent=1 // pred_region
      %218 = dma.done [#allocation3], 64
    $region29: #{iris_classifier_forward_fmajor.1} parent=1 // pred_fallthru
      _
    %219 = vsyncpa [#allocation3], 1

</llo_original>
